<compile_context>
chip_gen: v7x
topology: tpu7x:2x2x1
jax: 0.10.0
libtpu: 0.0.40
codegen_flags: <defaults>
</compile_context>

<pallas_src>
import functools

import jax
import jax.numpy as jnp
from jax.experimental import pallas as pl
from jax.experimental.pallas import tpu as pltpu


_LANE = 128
_MAX_BLOCK_B = 8192          # budget-limited anyway; big tiles amortize per-step overhead


def _round_up(x, m):
    return ((x + m - 1) // m) * m


def _cdiv(a, b):
    return -(-a // b)


def _tpu_hw():
    """(per-TensorCore VMEM capacity in bytes, TensorCores per chip), best-effort."""
    vmem = 64 * 1024 * 1024          # conservative default = v7x per-TC VMEM
    cores = 1
    try:
        info = pltpu.get_tpu_info()
        cap = getattr(info, "vmem_capacity_bytes", None)
        if cap:
            vmem = int(cap)
        for name in ("num_cores", "tensorcores_per_chip", "cores_per_chip"):
            val = getattr(info, name, None)
            if val:
                cores = int(val)
                break
    except Exception:
        pass
    if cores <= 1:
        try:
            kind = jax.devices()[0].device_kind.lower()
            if "v7" in kind:          # v7x: 2 TensorCores share the grid via megacore
                cores = 2
        except Exception:
            pass
    return vmem, max(1, cores)


def _pick_block_b(B, F, x_itemsize, vmem_budget, num_cores):
    """Largest batch tile (multiple of 16) whose real VMEM footprint fits the budget,
    then adjusted so the grid splits evenly across TensorCores."""
    F_lane = _round_up(F, _LANE)

    def footprint(b):
        x_tile = b * F_lane * x_itemsize            # streamed x tile (lane-padded in VMEM)
        o_tile = b * _LANE * 4                      # (b,1) f32 out block pads to (b,128)
        weights = (F_lane * 128 * 2                 # W1 bf16
                   + 128 * _LANE * 2                # W2 bf16 ((128,32) lane-padded)
                   + 3 * 8 * _LANE * 4)             # b1/b2/w3 f32, (1,.) padded to (8,128)
        staged = b * F_lane * 2                     # bf16 K-pad staging scratch
        h1 = b * _LANE * 4 + b * _LANE * 2          # f32 h1 + bf16 copy
        h2 = b * _LANE * 4                          # (b,32) f32, lane-padded
        return 2 * (x_tile + o_tile + weights) + staged + h1 + h2   # I/O double-buffered

    bb = min(_MAX_BLOCK_B, _round_up(B, 16))
    while bb > 16 and footprint(bb) > vmem_budget:
        bb = max(16, _round_up(bb // 2, 16))

    # Grid parity: >= 2 steps per TensorCore (pipeline overlap; on v7x both TCs busy) when
    # the batch is big enough to split, and a multiple of num_cores for balanced sharding.
    steps = _cdiv(B, bb)
    min_steps = 2 * num_cores
    if steps < min_steps and B >= 16 * min_steps:
        steps = min_steps
    if num_cores > 1:
        steps = _round_up(steps, num_cores)
    bb = min(bb, max(16, _round_up(_cdiv(B, steps), 16)))
    return bb


def _mlp_kernel(x_ref, w1_ref, b1_ref, w2_ref, b2_ref, w3_ref, b3_ref, o_ref, *xpad):
    if xpad:
        # F not lane-aligned: stage the streamed tile into a zero-padded bf16 VMEM buffer
        # so the MXU contraction dim is fully packed.  Re-zeroed every step (cheap VMEM
        # stores hidden under the x DMA) so it is correct under megacore grid sharding;
        # W1's padded rows are also zero, so the padding contributes exactly 0.
        (xpad_ref,) = xpad
        f = x_ref.shape[-1]
        xpad_ref[...] = jnp.zeros_like(xpad_ref)
        xpad_ref[:, :f] = x_ref[...].astype(jnp.bfloat16)
        x = xpad_ref[...]
    else:
        # Lane-aligned F: cast the streamed tile in-kernel (VPU op, free vs. the HBM read).
        x = x_ref[...].astype(jnp.bfloat16)

    # Layer 1: bf16 MXU matmul with f32 accumulation; bias + ReLU in f32.
    h1 = jnp.dot(x, w1_ref[...], preferred_element_type=jnp.float32)
    h1 = jnp.maximum(h1 + b1_ref[...], 0.0)

    # Layer 2: bf16 h1 (halves the VMEM round-trip at large block_b), f32 accumulation.
    h2 = jnp.dot(h1.astype(jnp.bfloat16), w2_ref[...], preferred_element_type=jnp.float32)
    h2 = jnp.maximum(h2 + b2_ref[...], 0.0)

    # Layer 3: an N=1 matmul wastes an MXU issue for one live lane; use a VPU multiply +
    # XLU lane reduce instead (both slots are otherwise idle).  b3 is an SMEM scalar.
    out = jnp.sum(h2 * w3_ref[...], axis=-1, keepdims=True) + b3_ref[0]
    o_ref[...] = out.astype(o_ref.dtype)


@functools.partial(jax.jit, static_argnames=("block_b",))
def three_layers_fc(x, w1, b1, w2, b2, w3, b3, *, block_b=None):
    """x:(B,F); w1:(F,128) b1:(1,128) w2:(128,32) b2:(1,32) w3:(1,32) b3:(1,) -> (B,1) f32."""
    B, F = x.shape
    F_pad = _round_up(F, _LANE)
    needs_pad = F_pad != F

    # Weights are tiny: padding / casting them costs nothing.  x itself is streamed as-is
    # (no wrapper pad/cast HBM passes); its bf16 cast happens in-kernel.
    w1_p = jnp.pad(w1, ((0, F_pad - F), (0, 0))) if needs_pad else w1
    w1_bf = w1_p.astype(jnp.bfloat16)
    w2_bf = w2.astype(jnp.bfloat16)
    b3_scalar = b3.reshape((1,)).astype(jnp.float32)        # SMEM scalar

    # Generation-aware VMEM budget (v7x: 32 MiB limit / 24 MiB budget; v5e/v6e: 64 / 48).
    vmem_cap, num_cores = _tpu_hw()
    vmem_limit = int(min(max(vmem_cap // 2, 32 * 1024 * 1024), 64 * 1024 * 1024))
    if num_cores > 1:                                        # v7x: only 64 MiB per TC
        vmem_limit = min(vmem_limit, 32 * 1024 * 1024)
    vmem_budget = (vmem_limit * 3) // 4

    if block_b is None:
        block_b = _pick_block_b(B, F, x.dtype.itemsize, vmem_budget, num_cores)
    assert block_b % 16 == 0, "block_b must be a multiple of 16 (bf16 sublane tile)"

    grid = (_cdiv(B, block_b),)
    rep = lambda i: (0, 0)       # weights/biases fully resident in VMEM every grid step

    scratch_shapes = (
        [pltpu.VMEM((block_b, F_pad), jnp.bfloat16)] if needs_pad else []
    )

    return pl.pallas_call(
        _mlp_kernel,
        out_shape=jax.ShapeDtypeStruct((B, 1), jnp.float32),
        grid_spec=pltpu.PrefetchScalarGridSpec(
            num_scalar_prefetch=0,
            grid=grid,
            in_specs=[
                # x streamed in caller dtype with unpadded last dim (== full array dim,
                # legal).  No pl.Buffered(3) by default: the pipeline is bandwidth-bound
                # at these block sizes and a third buffer only eats VMEM (shrinks block_b).
                pl.BlockSpec((block_b, F), lambda i: (i, 0)),
                pl.BlockSpec((F_pad, 128), rep),     # W1 (bf16, zero-padded rows)
                pl.BlockSpec((1, 128), rep),         # b1 (f32)
                pl.BlockSpec((128, 32), rep),        # W2 (bf16)
                pl.BlockSpec((1, 32), rep),          # b2 (f32)
                pl.BlockSpec((1, 32), rep),          # W3 row (f32)
                pl.BlockSpec(memory_space=pltpu.MemorySpace.SMEM),   # b3 scalar
            ],
            # (block_b, 1) output: total output traffic is only B*4 bytes, so the masked
            # narrow stores are negligible at large block_b.  A lane-dense relayout would
            # only pay off if a profile shows the writeback exposed.
            out_specs=pl.BlockSpec((block_b, 1), lambda i: (i, 0)),
            scratch_shapes=scratch_shapes,
        ),
        compiler_params=pltpu.CompilerParams(
            dimension_semantics=("parallel",),       # batch axis shards across TCs (v7x)
            vmem_limit_bytes=vmem_limit,
        ),
    )(x, w1_bf, b1, w2_bf, b2, w3, b3_scalar)


def init_params(key, input_num):
    """Deterministic synthetic parameters with PyTorch Linear init-like scaling."""
    ks = jax.random.split(key, 6)

    def linear(kw, kb, fan_in, w_shape, b_shape):
        bound = 1.0 / jnp.sqrt(fan_in)
        w = jax.random.uniform(kw, w_shape, jnp.float32, -bound, bound)
        b = jax.random.uniform(kb, b_shape, jnp.float32, -bound, bound)
        return w, b

    w1, b1 = linear(ks[0], ks[1], input_num, (input_num, 128), (1, 128))
    w2, b2 = linear(ks[2], ks[3], 128, (128, 32), (1, 32))
    w3, b3 = linear(ks[4], ks[5], 32, (1, 32), (1,))   # torch-style (out,in) row for fc3
    return w1, b1, w2, b2, w3, b3


def reference_f32(x, w1, b1, w2, b2, w3, b3):
    hp = jax.lax.Precision.HIGHEST
    h = jnp.maximum(jnp.dot(x, w1, precision=hp) + b1, 0.0)
    h = jnp.maximum(jnp.dot(h, w2, precision=hp) + b2, 0.0)
    return jnp.dot(h, w3.T, precision=hp) + b3


def reference_mixed(x, w1, b1, w2, b2, w3, b3):
    """Matches the kernel's precision policy: bf16 matmul operands, f32 accumulation."""
    h = jnp.dot(x.astype(jnp.bfloat16), w1.astype(jnp.bfloat16),
                preferred_element_type=jnp.float32)
    h = jnp.maximum(h + b1, 0.0)
    h = jnp.dot(h.astype(jnp.bfloat16), w2.astype(jnp.bfloat16),
                preferred_element_type=jnp.float32)
    h = jnp.maximum(h + b2, 0.0)
    return jnp.dot(h, w3.T, precision=jax.lax.Precision.HIGHEST) + b3


if __name__ == "__main__":
    key = jax.random.PRNGKey(0)
    k_x, k_p, k_x2 = jax.random.split(key, 3)

    # Test 1: F=50 exercises the in-kernel K-padding (staging-scratch) path; B=56 with
    # block_b=16 gives a multi-step grid plus a masked tail block.
    B, input_num = 56, 50
    x = jax.random.normal(k_x, (B, input_num), jnp.float32)
    params = init_params(k_p, input_num)
    out = jax.block_until_ready(three_layers_fc(x, *params, block_b=16))
    assert out.shape == (B, 1), out.shape
    assert jnp.allclose(out, reference_mixed(x, *params), atol=2e-2, rtol=2e-2), \
        "mismatch vs bf16-matched reference (F=50)"
    assert jnp.allclose(out, reference_f32(x, *params), atol=6e-2, rtol=6e-2), \
        "mismatch vs f32 reference (F=50)"

    # Test 2: lane-aligned F with auto-picked block_b (no staging scratch; exercises the
    # generation-aware tiling / grid-parity heuristics).
    B2, input_num2 = 512, 128
    x2 = jax.random.normal(k_x2, (B2, input_num2), jnp.float32)
    params2 = init_params(k_p, input_num2)
    out2 = jax.block_until_ready(three_layers_fc(x2, *params2))
    assert out2.shape == (B2, 1), out2.shape
    assert jnp.allclose(out2, reference_mixed(x2, *params2), atol=2e-2, rtol=2e-2), \
        "mismatch vs bf16-matched reference (F=128)"

    print("KERNEL_OK")
</pallas_src>

<mosaic_0001>
module attributes {stable_mosaic.version = 11 : i64} {
  func.func @_mlp_kernel(%arg0: i32, %arg1: memref<16x50xf32, #tpu.memory_space<vmem>>, %arg2: memref<128x128xbf16, #tpu.memory_space<vmem>>, %arg3: memref<1x128xf32, #tpu.memory_space<vmem>>, %arg4: memref<128x32xbf16, #tpu.memory_space<vmem>>, %arg5: memref<1x32xf32, #tpu.memory_space<vmem>>, %arg6: memref<1x32xf32, #tpu.memory_space<vmem>>, %arg7: memref<1xf32, #tpu.memory_space<smem>>, %arg8: memref<16x1xf32, #tpu.memory_space<vmem>>, %arg9: memref<16x128xbf16, #tpu.memory_space<vmem>>) attributes {dimension_semantics = [#tpu.dimension_semantics<parallel>], iteration_bounds = array<i64: 4>, scalar_prefetch = 0 : i64, scratch_operands = 1 : i64, tpu.core_type = #tpu.core_type<tc>, window_params = [{transform_indices = @transform_0, window_bounds = array<i64: 16, 50>}, {pipeline_mode = #tpu.pipeline_mode<synchronous>, transform_indices = @transform_1, window_bounds = array<i64: 128, 128>}, {pipeline_mode = #tpu.pipeline_mode<synchronous>, transform_indices = @transform_2, window_bounds = array<i64: 1, 128>}, {pipeline_mode = #tpu.pipeline_mode<synchronous>, transform_indices = @transform_3, window_bounds = array<i64: 128, 32>}, {pipeline_mode = #tpu.pipeline_mode<synchronous>, transform_indices = @transform_4, window_bounds = array<i64: 1, 32>}, {pipeline_mode = #tpu.pipeline_mode<synchronous>, transform_indices = @transform_5, window_bounds = array<i64: 1, 32>}, {transform_indices = @transform_6, window_bounds = array<i64: 1>}, {transform_indices = @transform_7, window_bounds = array<i64: 16, 1>}]} {
    %cst = arith.constant 0.000000e+00 : bf16
    %0 = vector.broadcast %cst : bf16 to vector<16x128xbf16>
    %c0 = arith.constant 0 : index
    %c0_0 = arith.constant 0 : index
    %1 = vector.load %arg9[%c0, %c0_0] : memref<16x128xbf16, #tpu.memory_space<vmem>>, vector<16x128xbf16>
    tpu.vector_store %arg9[%c0, %c0_0], %0 {strides = array<i32>} : memref<16x128xbf16, #tpu.memory_space<vmem>>, vector<16x128xbf16>,
    %c0_1 = arith.constant 0 : index
    %c0_2 = arith.constant 0 : index
    %2 = vector.load %arg1[%c0_1, %c0_2] : memref<16x50xf32, #tpu.memory_space<vmem>>, vector<16x50xf32>
    %3 = arith.truncf %2 : vector<16x50xf32> to vector<16x50xbf16>
    %c0_3 = arith.constant 0 : index
    %c0_4 = arith.constant 0 : index
    %4 = vector.load %arg9[%c0_3, %c0_4] : memref<16x128xbf16, #tpu.memory_space<vmem>>, vector<16x50xbf16>
    tpu.vector_store %arg9[%c0_3, %c0_4], %3 {strides = array<i32>} : memref<16x128xbf16, #tpu.memory_space<vmem>>, vector<16x50xbf16>,
    %c0_5 = arith.constant 0 : index
    %c0_6 = arith.constant 0 : index
    %5 = vector.load %arg9[%c0_5, %c0_6] : memref<16x128xbf16, #tpu.memory_space<vmem>>, vector<16x128xbf16>
    %c0_7 = arith.constant 0 : index
    %c0_8 = arith.constant 0 : index
    %6 = vector.load %arg2[%c0_7, %c0_8] : memref<128x128xbf16, #tpu.memory_space<vmem>>, vector<128x128xbf16>
    %cst_9 = arith.constant dense<0.000000e+00> : vector<16x128xf32>
    %7 = tpu.matmul %5, %6, %cst_9 {dimension_numbers = #tpu.dot_dimension_numbers<[1], [0], [0], [1], [0, 0, 1, 1], [], []>} : vector<16x128xbf16>, vector<128x128xbf16>, vector<16x128xf32> -> vector<16x128xf32>
    %c0_10 = arith.constant 0 : index
    %c0_11 = arith.constant 0 : index
    %8 = vector.load %arg3[%c0_10, %c0_11] : memref<1x128xf32, #tpu.memory_space<vmem>>, vector<1x128xf32>
    %9 = vector.broadcast %8 : vector<1x128xf32> to vector<16x128xf32>
    %10 = arith.addf %7, %9 : vector<16x128xf32>
    %cst_12 = arith.constant 0.000000e+00 : f32
    %11 = vector.broadcast %cst_12 : f32 to vector<16x128xf32>
    %12 = arith.maximumf %10, %11 : vector<16x128xf32>
    %13 = arith.truncf %12 : vector<16x128xf32> to vector<16x128xbf16>
    %c0_13 = arith.constant 0 : index
    %c0_14 = arith.constant 0 : index
    %14 = vector.load %arg4[%c0_13, %c0_14] : memref<128x32xbf16, #tpu.memory_space<vmem>>, vector<128x32xbf16>
    %cst_15 = arith.constant dense<0.000000e+00> : vector<16x32xf32>
    %15 = tpu.matmul %13, %14, %cst_15 {dimension_numbers = #tpu.dot_dimension_numbers<[1], [0], [0], [1], [0, 0, 1, 1], [], []>} : vector<16x128xbf16>, vector<128x32xbf16>, vector<16x32xf32> -> vector<16x32xf32>
    %c0_16 = arith.constant 0 : index
    %c0_17 = arith.constant 0 : index
    %16 = vector.load %arg5[%c0_16, %c0_17] : memref<1x32xf32, #tpu.memory_space<vmem>>, vector<1x32xf32>
    %17 = vector.broadcast %16 : vector<1x32xf32> to vector<16x32xf32>
    %18 = arith.addf %15, %17 : vector<16x32xf32>
    %cst_18 = arith.constant 0.000000e+00 : f32
    %19 = vector.broadcast %cst_18 : f32 to vector<16x32xf32>
    %20 = arith.maximumf %18, %19 : vector<16x32xf32>
    %c0_19 = arith.constant 0 : index
    %c0_20 = arith.constant 0 : index
    %21 = vector.load %arg6[%c0_19, %c0_20] : memref<1x32xf32, #tpu.memory_space<vmem>>, vector<1x32xf32>
    %22 = vector.broadcast %21 : vector<1x32xf32> to vector<16x32xf32>
    %23 = arith.mulf %20, %22 : vector<16x32xf32>
    %cst_21 = arith.constant dense<0.000000e+00> : vector<16xf32>
    %24 = vector.multi_reduction <add>, %23, %cst_21 [1] : vector<16x32xf32> to vector<16xf32>
    %25 = vector.shape_cast %24 : vector<16xf32> to vector<16x1xf32>
    %c0_22 = arith.constant 0 : index
    %26 = memref.load %arg7[%c0_22] : memref<1xf32, #tpu.memory_space<smem>>
    %27 = vector.broadcast %26 : f32 to vector<16x1xf32>
    %28 = arith.addf %25, %27 : vector<16x1xf32>
    %c0_23 = arith.constant 0 : index
    %c0_24 = arith.constant 0 : index
    %29 = vector.load %arg8[%c0_23, %c0_24] : memref<16x1xf32, #tpu.memory_space<vmem>>, vector<16x1xf32>
    tpu.vector_store %arg8[%c0_23, %c0_24], %28 {strides = array<i32>} : memref<16x1xf32, #tpu.memory_space<vmem>>, vector<16x1xf32>,
    return
  }
  func.func @transform_0(%arg0: i32) -> (i32, i32) {
    %c0_i32 = arith.constant 0 : i32
    %c0_i32_0 = arith.constant 0 : i32
    return %arg0, %c0_i32 : i32, i32
  }
  func.func @transform_1(%arg0: i32) -> (i32, i32) {
    %c0_i32 = arith.constant 0 : i32
    %c0_i32_0 = arith.constant 0 : i32
    %c0_i32_1 = arith.constant 0 : i32
    return %c0_i32, %c0_i32_0 : i32, i32
  }
  func.func @transform_2(%arg0: i32) -> (i32, i32) {
    %c0_i32 = arith.constant 0 : i32
    %c0_i32_0 = arith.constant 0 : i32
    %c0_i32_1 = arith.constant 0 : i32
    return %c0_i32, %c0_i32_0 : i32, i32
  }
  func.func @transform_3(%arg0: i32) -> (i32, i32) {
    %c0_i32 = arith.constant 0 : i32
    %c0_i32_0 = arith.constant 0 : i32
    %c0_i32_1 = arith.constant 0 : i32
    return %c0_i32, %c0_i32_0 : i32, i32
  }
  func.func @transform_4(%arg0: i32) -> (i32, i32) {
    %c0_i32 = arith.constant 0 : i32
    %c0_i32_0 = arith.constant 0 : i32
    %c0_i32_1 = arith.constant 0 : i32
    return %c0_i32, %c0_i32_0 : i32, i32
  }
  func.func @transform_5(%arg0: i32) -> (i32, i32) {
    %c0_i32 = arith.constant 0 : i32
    %c0_i32_0 = arith.constant 0 : i32
    %c0_i32_1 = arith.constant 0 : i32
    return %c0_i32, %c0_i32_0 : i32, i32
  }
  func.func @transform_6(%arg0: i32) -> i32 {
    %c0_i32 = arith.constant 0 : i32
    %c0_i32_0 = arith.constant 0 : i32
    return %c0_i32 : i32
  }
  func.func @transform_7(%arg0: i32) -> (i32, i32) {
    %c0_i32 = arith.constant 0 : i32
    %c0_i32_0 = arith.constant 0 : i32
    return %arg0, %c0_i32 : i32, i32
  }
}

</mosaic_0001>

<llo_original>
// kernel: three_layers_fc.1
$region0: #{three_layers_fc.1}
  #allocation0 [shape = 'u32[]', space=smem, size = 0x4, offset = 0x4, fixed_abs, tag = 'smem constant byte address 0x4 - core index']
  #allocation1 [shape = 'u32[144,128]{1,0:T(1,128)}', space=vmem, size = 0x12000, scoped, tag = 'internal scratch']
  #allocation2 [shape = 'bf16[16,128]{1,0:T(16,128)(2,1)}', space=vmem, size = 0x1000, scoped, tag = 'scratch operand']
  #allocation3 [shape = 'f32[1]{0:T(128)S(6)}', space=smem, size = 0x200, scoped, tag = 'scoped memory for three_layers_fc.1']
  %s0 = inlined_call_operand.vmem [shape: f32[56,50], index: 0, kind: input, shape index: {}]
  %s1 = inlined_call_operand.vmem [shape: bf16[128,128], index: 1, kind: input, shape index: {}]
  %s2 = inlined_call_operand.vmem [shape: f32[1,128], index: 2, kind: input, shape index: {}]
  %s3 = inlined_call_operand.vmem [shape: bf16[128,32], index: 3, kind: input, shape index: {}]
  %s4 = inlined_call_operand.vmem [shape: f32[1,32], index: 4, kind: input, shape index: {}]
  %s5 = inlined_call_operand.vmem [shape: f32[1,32], index: 5, kind: input, shape index: {}]
  %s6 = inlined_call_operand.<no memory space> [shape: f32[1], index: 6, kind: input, shape index: {}]
  %s7 = inlined_call_operand.vmem [shape: f32[56,1], index: 7, kind: output, shape index: {}]
  %s8 = sld [smem:[#allocation0]]
  $region109: #{three_layers_fc.1} parent=0
    _
  %s10 = ssub.s32 1, %s8
  %s11 = scalar_select 0, %s10, %s8
  %12 = sst [smem:[#allocation3]] %s6
  $region1: #{three_layers_fc.1} parent=0
    #allocation4 [shape = 'u8[16384]{0}', space=vmem, size = 0x4000, scoped, tag = 'output window, operand 0']
    loop: start=0, step=1, limit=6
    $region2: #{three_layers_fc.1} parent=1 // loop_pre_header
      _
    $region3: #{three_layers_fc.1} parent=1 // loop_header
      %s14 = sphi 0, %s18
      %p15 = scmp.ge.s32.totalorder %s14, 6
      %s24 = sphi 0, %s26
      %s27 = sphi 0, %s24
      %s28 = sphi 0, %s27
      %s44 = sphi 0, %s28
      %s48 = sphi 0, %s48
      %s50 = sphi 0, %s48
      %s51 = sphi 0, %s50
      %s65 = sphi 0, %s51
      %s69 = sphi 0, %s69
      %s71 = sphi 0, %s69
      %s72 = sphi 0, %s71
      %s86 = sphi 0, %s72
      %s90 = sphi 0, %s90
      %s92 = sphi 0, %s90
      %s93 = sphi 0, %s92
      %s107 = sphi 0, %s93
      %s111 = sphi 0, %s111
      %s113 = sphi 0, %s111
      %s114 = sphi 0, %s113
      %s128 = sphi 0, %s114
      %s132 = sphi 0, %s132
      %s134 = sphi 0, %s132
      %s135 = sphi 0, %s134
      %s149 = sphi 0, %s135
      %s153 = sphi 0, %s153
      %s155 = sphi 0, %s153
      %s156 = sphi 0, %s155
      %s170 = sphi 0, %s156
      %s176 = sphi 0, %s178
      %s179 = sphi 0, %s176
      %s180 = sphi 0, %s179
      %s196 = sphi 0, %s180
    $region4: #{three_layers_fc.1} parent=1 // loop_header_branch
      %17 = sbr.rel (%p15) target = $region8
    $region5: #{three_layers_fc.1} parent=1 // loop_body
      %s19 = ssub.s32 %s14, 1
      %s20 = ssub.s32 %s14, 2
      %s21 = sadd.s32 %s14, 1
      %s22 = ssub.s32 %s14, %s21
      %p23 = scmp.eq.s32.totalorder %s22, 0
      %s25 = sadd.s32 %s24, 1
      %s26 = scalar_select %p23, %s24, %s25
      %p29 = pneg %p23
      %p30 = scmp.eq.s32.totalorder %s14, 3
      %p31 = por %p29, %p30
      %p32 = scmp.ne.s32.totalorder %s24, %s27
      %p33 = scmp.eq.s32.totalorder %s14, 0
      %p34 = por %p32, %p33
      %p35 = scmp.ne.s32.totalorder %s24, %s27
      %p36 = scmp.eq.s32.totalorder %s19, 3
      %p37 = por %p35, %p36
      %p38 = scmp.ne.s32.totalorder %s27, %s28
      %p39 = scmp.eq.s32.totalorder %s19, 0
      %p40 = por %p38, %p39
      %p41 = scmp.ne.s32.totalorder %s27, %s28
      %p42 = scmp.eq.s32.totalorder %s20, 3
      %p43 = por %p41, %p42
      %p45 = scmp.ne.s32.totalorder %s28, %s44
      %p46 = scmp.eq.s32.totalorder %s20, 0
      %p47 = por %p45, %p46
      %s49 = sadd.s32 %s48, 1
      %p52 = scmp.eq.s32.totalorder %s14, 3
      %p53 = scmp.ne.s32.totalorder %s48, %s50
      %p54 = scmp.eq.s32.totalorder %s14, 0
      %p55 = por %p53, %p54
      %p56 = scmp.ne.s32.totalorder %s48, %s50
      %p57 = scmp.eq.s32.totalorder %s19, 3
      %p58 = por %p56, %p57
      %p59 = scmp.ne.s32.totalorder %s50, %s51
      %p60 = scmp.eq.s32.totalorder %s19, 0
      %p61 = por %p59, %p60
      %p62 = scmp.ne.s32.totalorder %s50, %s51
      %p63 = scmp.eq.s32.totalorder %s20, 3
      %p64 = por %p62, %p63
      %p66 = scmp.ne.s32.totalorder %s51, %s65
      %p67 = scmp.eq.s32.totalorder %s20, 0
      %p68 = por %p66, %p67
      %s70 = sadd.s32 %s69, 1
      %p73 = scmp.eq.s32.totalorder %s14, 3
      %p74 = scmp.ne.s32.totalorder %s69, %s71
      %p75 = scmp.eq.s32.totalorder %s14, 0
      %p76 = por %p74, %p75
      %p77 = scmp.ne.s32.totalorder %s69, %s71
      %p78 = scmp.eq.s32.totalorder %s19, 3
      %p79 = por %p77, %p78
      %p80 = scmp.ne.s32.totalorder %s71, %s72
      %p81 = scmp.eq.s32.totalorder %s19, 0
      %p82 = por %p80, %p81
      %p83 = scmp.ne.s32.totalorder %s71, %s72
      %p84 = scmp.eq.s32.totalorder %s20, 3
      %p85 = por %p83, %p84
      %p87 = scmp.ne.s32.totalorder %s72, %s86
      %p88 = scmp.eq.s32.totalorder %s20, 0
      %p89 = por %p87, %p88
      %s91 = sadd.s32 %s90, 1
      %p94 = scmp.eq.s32.totalorder %s14, 3
      %p95 = scmp.ne.s32.totalorder %s90, %s92
      %p96 = scmp.eq.s32.totalorder %s14, 0
      %p97 = por %p95, %p96
      %p98 = scmp.ne.s32.totalorder %s90, %s92
      %p99 = scmp.eq.s32.totalorder %s19, 3
      %p100 = por %p98, %p99
      %p101 = scmp.ne.s32.totalorder %s92, %s93
      %p102 = scmp.eq.s32.totalorder %s19, 0
      %p103 = por %p101, %p102
      %p104 = scmp.ne.s32.totalorder %s92, %s93
      %p105 = scmp.eq.s32.totalorder %s20, 3
      %p106 = por %p104, %p105
      %p108 = scmp.ne.s32.totalorder %s93, %s107
      %p109 = scmp.eq.s32.totalorder %s20, 0
      %p110 = por %p108, %p109
      %s112 = sadd.s32 %s111, 1
      %p115 = scmp.eq.s32.totalorder %s14, 3
      %p116 = scmp.ne.s32.totalorder %s111, %s113
      %p117 = scmp.eq.s32.totalorder %s14, 0
      %p118 = por %p116, %p117
      %p119 = scmp.ne.s32.totalorder %s111, %s113
      %p120 = scmp.eq.s32.totalorder %s19, 3
      %p121 = por %p119, %p120
      %p122 = scmp.ne.s32.totalorder %s113, %s114
      %p123 = scmp.eq.s32.totalorder %s19, 0
      %p124 = por %p122, %p123
      %p125 = scmp.ne.s32.totalorder %s113, %s114
      %p126 = scmp.eq.s32.totalorder %s20, 3
      %p127 = por %p125, %p126
      %p129 = scmp.ne.s32.totalorder %s114, %s128
      %p130 = scmp.eq.s32.totalorder %s20, 0
      %p131 = por %p129, %p130
      %s133 = sadd.s32 %s132, 1
      %p136 = scmp.eq.s32.totalorder %s14, 3
      %p137 = scmp.ne.s32.totalorder %s132, %s134
      %p138 = scmp.eq.s32.totalorder %s14, 0
      %p139 = por %p137, %p138
      %p140 = scmp.ne.s32.totalorder %s132, %s134
      %p141 = scmp.eq.s32.totalorder %s19, 3
      %p142 = por %p140, %p141
      %p143 = scmp.ne.s32.totalorder %s134, %s135
      %p144 = scmp.eq.s32.totalorder %s19, 0
      %p145 = por %p143, %p144
      %p146 = scmp.ne.s32.totalorder %s134, %s135
      %p147 = scmp.eq.s32.totalorder %s20, 3
      %p148 = por %p146, %p147
      %p150 = scmp.ne.s32.totalorder %s135, %s149
      %p151 = scmp.eq.s32.totalorder %s20, 0
      %p152 = por %p150, %p151
      %s154 = sadd.s32 %s153, 1
      %p157 = scmp.eq.s32.totalorder %s14, 3
      %p158 = scmp.ne.s32.totalorder %s153, %s155
      %p159 = scmp.eq.s32.totalorder %s14, 0
      %p160 = por %p158, %p159
      %p161 = scmp.ne.s32.totalorder %s153, %s155
      %p162 = scmp.eq.s32.totalorder %s19, 3
      %p163 = por %p161, %p162
      %p164 = scmp.ne.s32.totalorder %s155, %s156
      %p165 = scmp.eq.s32.totalorder %s19, 0
      %p166 = por %p164, %p165
      %p167 = scmp.ne.s32.totalorder %s155, %s156
      %p168 = scmp.eq.s32.totalorder %s20, 3
      %p169 = por %p167, %p168
      %p171 = scmp.ne.s32.totalorder %s156, %s170
      %p172 = scmp.eq.s32.totalorder %s20, 0
      %p173 = por %p171, %p172
      %s174 = ssub.s32 %s14, %s21
      %p175 = scmp.eq.s32.totalorder %s174, 0
      %s177 = sadd.s32 %s176, 1
      %s178 = scalar_select %p175, %s176, %s177
      %p181 = pneg %p175
      %p182 = scmp.eq.s32.totalorder %s14, 3
      %p183 = por %p181, %p182
      %p184 = scmp.ne.s32.totalorder %s176, %s179
      %p185 = scmp.eq.s32.totalorder %s14, 0
      %p186 = por %p184, %p185
      %p187 = scmp.ne.s32.totalorder %s176, %s179
      %p188 = scmp.eq.s32.totalorder %s19, 3
      %p189 = por %p187, %p188
      %p190 = scmp.ne.s32.totalorder %s179, %s180
      %p191 = scmp.eq.s32.totalorder %s19, 0
      %p192 = por %p190, %p191
      %p193 = scmp.ne.s32.totalorder %s179, %s180
      %p194 = scmp.eq.s32.totalorder %s20, 3
      %p195 = por %p193, %p194
      %p197 = scmp.ne.s32.totalorder %s180, %s196
      %p198 = scmp.eq.s32.totalorder %s20, 0
      %p199 = por %p197, %p198
      %p200 = scmp.le.s32.totalorder 1, %s14
      %p201 = scmp.lt.s32.totalorder %s14, 5
      %p202 = pnand %p200, %p201
      %p203 = pneg %p202
      // Predicated region
      $region9: #{three_layers_fc.1} parent=5 // pred_check
        _
      $region10: #{three_layers_fc.1} parent=5 // pred_check_branch
        %205 = sbr.rel (%p202) target = $region12
      $region11: #{three_layers_fc.1} parent=5 // pred_region
        %s206 = ssub.s32 %s14, 1
        // Predicated region
        $region13: #{three_layers_fc.1} parent=11 // pred_check
          %p207 = pneg %p61
        $region14: #{three_layers_fc.1} parent=11 // pred_check_branch
          %209 = sbr.rel (%p207) target = $region16
        $region15: #{three_layers_fc.1} parent=11 // pred_region
          _
        $region16: #{three_layers_fc.1} parent=11 // pred_fallthru
          _
        // Predicated region
        $region17: #{three_layers_fc.1} parent=11 // pred_check
          %p210 = pneg %p82
        $region18: #{three_layers_fc.1} parent=11 // pred_check_branch
          %212 = sbr.rel (%p210) target = $region20
        $region19: #{three_layers_fc.1} parent=11 // pred_region
          _
        $region20: #{three_layers_fc.1} parent=11 // pred_fallthru
          _
        // Predicated region
        $region21: #{three_layers_fc.1} parent=11 // pred_check
          %p213 = pneg %p103
        $region22: #{three_layers_fc.1} parent=11 // pred_check_branch
          %215 = sbr.rel (%p213) target = $region24
        $region23: #{three_layers_fc.1} parent=11 // pred_region
          _
        $region24: #{three_layers_fc.1} parent=11 // pred_fallthru
          _
        // Predicated region
        $region25: #{three_layers_fc.1} parent=11 // pred_check
          %p216 = pneg %p124
        $region26: #{three_layers_fc.1} parent=11 // pred_check_branch
          %218 = sbr.rel (%p216) target = $region28
        $region27: #{three_layers_fc.1} parent=11 // pred_region
          _
        $region28: #{three_layers_fc.1} parent=11 // pred_fallthru
          _
        // Predicated region
        $region29: #{three_layers_fc.1} parent=11 // pred_check
          %p219 = pneg %p145
        $region30: #{three_layers_fc.1} parent=11 // pred_check_branch
          %221 = sbr.rel (%p219) target = $region32
        $region31: #{three_layers_fc.1} parent=11 // pred_region
          _
        $region32: #{three_layers_fc.1} parent=11 // pred_fallthru
          _
        // Predicated region
        $region33: #{three_layers_fc.1} parent=11 // pred_check
          %p222 = pneg %p166
        $region34: #{three_layers_fc.1} parent=11 // pred_check_branch
          %224 = sbr.rel (%p222) target = $region36
        $region35: #{three_layers_fc.1} parent=11 // pred_region
          _
        $region36: #{three_layers_fc.1} parent=11 // pred_fallthru
          _
      $region12: #{three_layers_fc.1} parent=5 // pred_fallthru
        _
      %p225 = scmp.lt.s32.totalorder %s14, 4
      // Predicated region
      $region37: #{three_layers_fc.1} parent=5 // pred_check
        %p226 = pneg %p225
      $region38: #{three_layers_fc.1} parent=5 // pred_check_branch
        %228 = sbr.rel (%p226) target = $region40
      $region39: #{three_layers_fc.1} parent=5 // pred_region
        // Predicated region
        $region41: #{three_layers_fc.1} parent=39 // pred_check
          %p229 = pneg %p34
        $region42: #{three_layers_fc.1} parent=39 // pred_check_branch
          %231 = sbr.rel (%p229) target = $region44
        $region43: #{three_layers_fc.1} parent=39 // pred_region
          %s232 = smul.u32 2, %s14
          %s233 = ssub.s32 7, %s232
          %p234 = scmp.lt.s32.totalorder %s233, 2
          %s235 = scalar_select %p234, %s233, 2
          %s236 = smul.u32 128, %s235
          %p237 = scmp.lt.s32.totalorder %s232, 6
          %s238 = scalar_select %p237, %s232, 6
          %s239 = smul.addr %s238, 8
          %s240 = scalar_lea.vmem %s0, %s239
          %s241 = smul.u32 2, %s14
          %s242 = ssub.s32 7, %s241
          %p243 = scmp.lt.s32.totalorder %s242, 2
          %s244 = scalar_select %p243, %s242, 2
          %s245 = smul.u32 128, %s244
        $region44: #{three_layers_fc.1} parent=39 // pred_fallthru
          _
      $region40: #{three_layers_fc.1} parent=5 // pred_fallthru
        _
      %p246 = scmp.le.s32.totalorder 1, %s14
      %p247 = scmp.lt.s32.totalorder %s14, 5
      %p248 = pnand %p246, %p247
      %p249 = pneg %p248
      // Predicated region
      $region45: #{three_layers_fc.1} parent=5 // pred_check
        _
      $region46: #{three_layers_fc.1} parent=5 // pred_check_branch
        %251 = sbr.rel (%p248) target = $region48
      $region47: #{three_layers_fc.1} parent=5 // pred_region
        %s252 = ssub.s32 %s14, 1
        %s253 = smul.u32 2, %s19
        %s254 = ssub.s32 7, %s253
        %p255 = scmp.lt.s32.totalorder %s254, 2
        %s256 = scalar_select %p255, %s254, 2
        %s257 = smul.u32 128, %s256
        %p258 = scmp.lt.s32.totalorder %s253, 6
        %s259 = scalar_select %p258, %s253, 6
        %s260 = smul.addr %s259, 8
        %s261 = scalar_lea.vmem %s0, %s260
        %p262 = pneg %p40
        %p263 = pneg %p37
        %p264 = pneg %p61
        %p265 = pneg %p58
        %p266 = pneg %p82
        %p267 = pneg %p79
        %p268 = pneg %p103
        %p269 = pneg %p100
        %p270 = pneg %p124
        %p271 = pneg %p121
        %p272 = pneg %p145
        %p273 = pneg %p142
        %p274 = pneg %p166
        %p275 = pneg %p163
        %p276 = pneg %p192
        %p277 = pneg %p189
        %s278 = sand.u32 %s179, 1
        %s279 = sand.u32 %s179, 1
        %s280 = smul.addr %s279, 16
        %s281 = scalar_lea.vmem [#allocation4], %s280
        %s282 = smul.u32 2, %s19
        %s283 = ssub.s32 7, %s282
        %p284 = scmp.lt.s32.totalorder %s283, 2
        %s285 = scalar_select %p284, %s283, 2
        %s286 = smul.u32 128, %s285
        %p287 = scmp.lt.s32.totalorder %s282, 6
        %s288 = scalar_select %p287, %s282, 6
        %s289 = smul.addr %s288, 8
        %s290 = scalar_lea.vmem %s0, %s289
        %s291 = smul.u32 2, %s19
        %s292 = ssub.s32 7, %s291
        %p293 = scmp.lt.s32.totalorder %s292, 2
        %s294 = scalar_select %p293, %s292, 2
        %s295 = smul.u32 128, %s294
        %s296 = smul.u32 2, %s19
        %s297 = ssub.s32 7, %s296
        %p298 = scmp.lt.s32.totalorder %s297, 2
        %s299 = scalar_select %p298, %s297, 2
        %s300 = smul.u32 128, %s299
        %302 = vst [vmem:[#allocation2] sm:$0xff] 0
        %v303 = vld [vmem:[%s290] sm:$0xff]
        %v304 = vld [vmem:[%s290 + $0x8] sm:$0xff]
        %v305 = vpack.c.bf16 %v304, %v303
        %vm306 = vcmask 408576
        %307 = vst.msk [vmem:[#allocation2] sm:$0xff] %vm306, %v305
        %v308 = vld [vmem:[#allocation2] sm:$0xff]
        %v309 = vld [vmem:[%s1] sm:$0xf]
        %v310 = vld [vmem:[%s1 + $0x4] sm:$0xf]
        %v311 = vld [vmem:[%s1 + $0x8] sm:$0xf]
        %v312 = vld [vmem:[%s1 + $0xc] sm:$0xf]
        %v313 = vld [vmem:[%s1 + $0x10] sm:$0xf]
        %v314 = vld [vmem:[%s1 + $0x14] sm:$0xf]
        %v315 = vld [vmem:[%s1 + $0x18] sm:$0xf]
        %v316 = vld [vmem:[%s1 + $0x1c] sm:$0xf]
        %v317 = vld [vmem:[%s1 + $0x20] sm:$0xf]
        %v318 = vld [vmem:[%s1 + $0x24] sm:$0xf]
        %v319 = vld [vmem:[%s1 + $0x28] sm:$0xf]
        %v320 = vld [vmem:[%s1 + $0x2c] sm:$0xf]
        %v321 = vld [vmem:[%s1 + $0x30] sm:$0xf]
        %v322 = vld [vmem:[%s1 + $0x34] sm:$0xf]
        %v323 = vld [vmem:[%s1 + $0x38] sm:$0xf]
        %v324 = vld [vmem:[%s1 + $0x3c] sm:$0xf]
        %v325 = vld [vmem:[%s2] sm:$0x1]
        %v327 = vlaneseq
        %v328 = vshrl.u32 %v327, 7
        %v329 = vsub.s32 0, %v328
        %v330 = vrot.slane %v325, %v329
        %v348 = vunpack.c.l.b16 %v309
        %v349 = vunpack.c.l.b16 %v310
        %v350 = vunpack.c.l.b16 %v311
        %v351 = vunpack.c.l.b16 %v312
        %v352 = vunpack.c.l.b16 %v313
        %v353 = vunpack.c.l.b16 %v314
        %v354 = vunpack.c.l.b16 %v315
        %v355 = vunpack.c.l.b16 %v316
        %v356 = vunpack.c.l.b16 %v317
        %v357 = vunpack.c.l.b16 %v318
        %v358 = vunpack.c.l.b16 %v319
        %v359 = vunpack.c.l.b16 %v320
        %v360 = vunpack.c.l.b16 %v321
        %v361 = vunpack.c.l.b16 %v322
        %v362 = vunpack.c.l.b16 %v323
        %v363 = vunpack.c.l.b16 %v324
        %v364 = vpack.c.b16 %v349, %v348
        %v365 = vpack.c.b16 %v351, %v350
        %v366 = vpack.c.b16 %v353, %v352
        %v367 = vpack.c.b16 %v355, %v354
        %v368 = vpack.c.b16 %v357, %v356
        %v369 = vpack.c.b16 %v359, %v358
        %v370 = vpack.c.b16 %v361, %v360
        %v371 = vpack.c.b16 %v363, %v362
        %380 = vmatprep.subr.bf16.mxu0 0
        %381 = vmatpush1.bf16.msra.mxu0 %v364
        %382 = vmatprep.subr.bf16.mxu0 0
        %383 = vmatpush1.bf16.msra.mxu0 %v365
        %384 = vmatprep.subr.bf16.mxu0 0
        %385 = vmatpush1.bf16.msra.mxu0 %v366
        %386 = vmatprep.subr.bf16.mxu0 0
        %387 = vmatpush1.bf16.msra.mxu0 %v367
        %388 = vmatprep.subr.bf16.mxu0 0
        %389 = vmatpush1.bf16.msra.mxu0 %v368
        %390 = vmatprep.subr.bf16.mxu0 0
        %391 = vmatpush1.bf16.msra.mxu0 %v369
        %392 = vmatprep.subr.bf16.mxu0 0
        %393 = vmatpush1.bf16.msra.mxu0 %v370
        %394 = vmatprep.subr.bf16.mxu0 0
        %395 = vmatpush1.bf16.msra.mxu0 %v371
        %396 = vmatprep.subr.bf16.mxu0 0
        %397 = vmatpush1.bf16.msra.mxu0 0
        %398 = vmatprep.subr.bf16.mxu0 0
        %399 = vmatpush1.bf16.msra.mxu0 0
        %400 = vmatprep.subr.bf16.mxu0 0
        %401 = vmatpush1.bf16.msra.mxu0 0
        %402 = vmatprep.subr.bf16.mxu0 0
        %403 = vmatpush1.bf16.msra.mxu0 0
        %404 = vmatprep.subr.bf16.mxu0 0
        %405 = vmatpush1.bf16.msra.mxu0 0
        %406 = vmatprep.subr.bf16.mxu0 0
        %407 = vmatpush1.bf16.msra.mxu0 0
        %408 = vmatprep.subr.bf16.mxu0 0
        %409 = vmatpush1.bf16.msra.mxu0 0
        %410 = vmatprep.subr.bf16.mxu0 0
        %411 = vmatpush1.bf16.msra.mxu0 0
        %412 = vmatprep.mubr.bf16.mxu0 0
        %413 = vmatmul.mubr.bf16.gmra.mrb[0].mxu0 %v308
        %v414 = vpop.f32.mrb[0].mxu0
        %v415 = vadd.f32 %v330, %v414
        %v416 = vpop.f32.mrb[0].mxu0
        %v417 = vpop.f32.mrb[0].mxu0
        %v418 = vadd.f32 %v330, %v417
        %v419 = vpop.f32.mrb[0].mxu0
        %420 = vdwg.mxu0
        %v421 = vmax.f32 %v415, 0.0
        %v422 = vmax.f32 %v418, 0.0
        %v423 = vpack.c.bf16 %v422, %v421
        %v424 = vld [vmem:[%s3] sm:$0xf]
        %v425 = vld [vmem:[%s3 + $0x4] sm:$0xf]
        %v426 = vld [vmem:[%s3 + $0x8] sm:$0xf]
        %v427 = vld [vmem:[%s3 + $0xc] sm:$0xf]
        %v428 = vld [vmem:[%s3 + $0x10] sm:$0xf]
        %v429 = vld [vmem:[%s3 + $0x14] sm:$0xf]
        %v430 = vld [vmem:[%s3 + $0x18] sm:$0xf]
        %v431 = vld [vmem:[%s3 + $0x1c] sm:$0xf]
        %v432 = vld [vmem:[%s3 + $0x20] sm:$0xf]
        %v433 = vld [vmem:[%s3 + $0x24] sm:$0xf]
        %v434 = vld [vmem:[%s3 + $0x28] sm:$0xf]
        %v435 = vld [vmem:[%s3 + $0x2c] sm:$0xf]
        %v436 = vld [vmem:[%s3 + $0x30] sm:$0xf]
        %v437 = vld [vmem:[%s3 + $0x34] sm:$0xf]
        %v438 = vld [vmem:[%s3 + $0x38] sm:$0xf]
        %v439 = vld [vmem:[%s3 + $0x3c] sm:$0xf]
        %v440 = vld [vmem:[%s4] sm:$0x1]
        %v442 = vlaneseq
        %v443 = vshrl.u32 %v442, 7
        %v444 = vsub.s32 0, %v443
        %v445 = vrot.slane %v440, %v444
        %v463 = vunpack.c.l.b16 %v424
        %v464 = vunpack.c.l.b16 %v425
        %v465 = vunpack.c.l.b16 %v426
        %v466 = vunpack.c.l.b16 %v427
        %v467 = vunpack.c.l.b16 %v428
        %v468 = vunpack.c.l.b16 %v429
        %v469 = vunpack.c.l.b16 %v430
        %v470 = vunpack.c.l.b16 %v431
        %v471 = vunpack.c.l.b16 %v432
        %v472 = vunpack.c.l.b16 %v433
        %v473 = vunpack.c.l.b16 %v434
        %v474 = vunpack.c.l.b16 %v435
        %v475 = vunpack.c.l.b16 %v436
        %v476 = vunpack.c.l.b16 %v437
        %v477 = vunpack.c.l.b16 %v438
        %v478 = vunpack.c.l.b16 %v439
        %v479 = vpack.c.b16 %v464, %v463
        %v480 = vpack.c.b16 %v466, %v465
        %v481 = vpack.c.b16 %v468, %v467
        %v482 = vpack.c.b16 %v470, %v469
        %v483 = vpack.c.b16 %v472, %v471
        %v484 = vpack.c.b16 %v474, %v473
        %v485 = vpack.c.b16 %v476, %v475
        %v486 = vpack.c.b16 %v478, %v477
        %495 = vmatprep.subr.bf16.mxu0 0
        %496 = vmatpush1.bf16.msra.mxu0 %v479
        %497 = vmatprep.subr.bf16.mxu0 0
        %498 = vmatpush1.bf16.msra.mxu0 %v480
        %499 = vmatprep.subr.bf16.mxu0 0
        %500 = vmatpush1.bf16.msra.mxu0 %v481
        %501 = vmatprep.subr.bf16.mxu0 0
        %502 = vmatpush1.bf16.msra.mxu0 %v482
        %503 = vmatprep.subr.bf16.mxu0 0
        %504 = vmatpush1.bf16.msra.mxu0 %v483
        %505 = vmatprep.subr.bf16.mxu0 0
        %506 = vmatpush1.bf16.msra.mxu0 %v484
        %507 = vmatprep.subr.bf16.mxu0 0
        %508 = vmatpush1.bf16.msra.mxu0 %v485
        %509 = vmatprep.subr.bf16.mxu0 0
        %510 = vmatpush1.bf16.msra.mxu0 %v486
        %511 = vmatprep.subr.bf16.mxu0 0
        %512 = vmatpush1.bf16.msra.mxu0 0
        %513 = vmatprep.subr.bf16.mxu0 0
        %514 = vmatpush1.bf16.msra.mxu0 0
        %515 = vmatprep.subr.bf16.mxu0 0
        %516 = vmatpush1.bf16.msra.mxu0 0
        %517 = vmatprep.subr.bf16.mxu0 0
        %518 = vmatpush1.bf16.msra.mxu0 0
        %519 = vmatprep.subr.bf16.mxu0 0
        %520 = vmatpush1.bf16.msra.mxu0 0
        %521 = vmatprep.subr.bf16.mxu0 0
        %522 = vmatpush1.bf16.msra.mxu0 0
        %523 = vmatprep.subr.bf16.mxu0 0
        %524 = vmatpush1.bf16.msra.mxu0 0
        %525 = vmatprep.subr.bf16.mxu0 0
        %526 = vmatpush1.bf16.msra.mxu0 0
        %527 = vmatprep.mubr.bf16.mxu0 0
        %528 = vmatmul.mubr.bf16.gmra.mrb[0].mxu0 %v423
        %v529 = vpop.f32.mrb[0].mxu0
        %v530 = vadd.f32 %v445, %v529
        %v531 = vpop.f32.mrb[0].mxu0
        %v532 = vpop.f32.mrb[0].mxu0
        %v533 = vadd.f32 %v445, %v532
        %v534 = vpop.f32.mrb[0].mxu0
        %535 = vdwg.mxu0
        %v536 = vmax.f32 %v530, 0.0
        %v537 = vmax.f32 %v533, 0.0
        %v538 = vld [vmem:[%s5] sm:$0x1]
        %v540 = vlaneseq
        %v541 = vshrl.u32 %v540, 7
        %v542 = vsub.s32 0, %v541
        %v543 = vrot.slane %v538, %v542
        %v545 = vmul.f32 %v536, %v543
        %v546 = vmul.f32 %v537, %v543
        %vm547 = vcmask 261120
        %v548 = vsel %vm547, %v545, 0.0
        %549 = vadd.xlane.f32.xlu0 %v548
        %v550 = vpop.xlane.xlu0 %549
        %v551 = vsel %vm547, %v546, 0.0
        %552 = vadd.xlane.f32.xlu0 %v551
        %v553 = vpop.xlane.xlu0 %552
        %s554 = sld [smem:[#allocation3]]
        %v555 = vstv %s554
        %v556 = vadd.f32 %v550, %v555
        %v557 = vadd.f32 %v553, %v555
        %vm558 = vcmask 7168
        %559 = vst.msk [vmem:[%s281] sm:$0xff] %vm558, %v556
        %560 = vst.msk [vmem:[%s281 + $0x8] sm:$0xff] %vm558, %v557
        %s561 = sand.u32 %s179, 1
        %s562 = sand.u32 %s179, 1
        %s563 = smul.addr %s562, 16
        %s564 = scalar_lea.vmem [#allocation4], %s563
        // Predicated region
        $region49: #{three_layers_fc.1} parent=47 // pred_check
          %p565 = pneg %p189
        $region50: #{three_layers_fc.1} parent=47 // pred_check_branch
          %567 = sbr.rel (%p565) target = $region52
        $region51: #{three_layers_fc.1} parent=47 // pred_region
          %s568 = smul.u32 2, %s19
          %s569 = ssub.s32 7, %s568
          %p570 = scmp.lt.s32.totalorder %s569, 2
          %s571 = scalar_select %p570, %s569, 2
          %s572 = smul.u32 128, %s571
          %p573 = scmp.ne.s32.totalorder 0, %s572
          %s574 = smul.addr %s568, 8
          %s575 = scalar_lea.vmem %s7, %s574
          // Predicated region
          $region53: #{three_layers_fc.1} parent=51 // pred_check
            %p576 = pneg %p573
          $region54: #{three_layers_fc.1} parent=51 // pred_check_branch
            %578 = sbr.rel (%p576) target = $region56
          $region55: #{three_layers_fc.1} parent=51 // pred_region
            // Predicated region
            $region57: #{three_layers_fc.1} parent=55 // pred_check
              _
            $region58: #{three_layers_fc.1} parent=55 // pred_check_branch
              %580 = sbr.rel (0) target = $region60
            $region59: #{three_layers_fc.1} parent=55 // pred_region
              // Predicated region
              $region79: #{three_layers_fc.1} parent=59 // pred_check
                _
              $region80: #{three_layers_fc.1} parent=59 // pred_check_branch
                %631 = sbr.rel (0) target = $region82
              $region81: #{three_layers_fc.1} parent=59 // pred_region
                %s632 = sshrl.u32 %s571, 1
                // While loop
                $region83: #{three_layers_fc.1} parent=81 // loop_pre_header
                  _
                $region84: #{three_layers_fc.1} parent=81 // loop_header
                  %s634 = sphi 0, %s636
                  %p635 = scmp.ge.s32.totalorder %s634, %s632
                  %s639 = sphi 0, %s648
                  %s640 = sphi %s564, %s651
                  %s641 = sphi %s575, %s652
                $region85: #{three_layers_fc.1} parent=81 // loop_header_branch
                  %638 = sbr.rel (%p635) target = $region89
                $region86: #{three_layers_fc.1} parent=81 // loop_body
                  %v642 = vld [vmem:[%s640] sm:$0xff]
                  %643 = vst [vmem:[%s641] sm:$0xff] %v642
                  %v644 = vld [vmem:[%s640 + $0x8] sm:$0xff]
                  %645 = vst [vmem:[%s641 + $0x8] sm:$0xff] %v644
                  %s646 = sadd.s32 1, %s639
                  %p647 = scmp.ge.s32.totalorder %s646, %s632
                  %s648 = scalar_select %p647, 0, %s646
                  %s649 = smul.u32 %s648, 16
                  %s650 = smul.u32 %s648, 16
                  %s651 = scalar_lea.vmem %s564, %s649 [#allocation4]
                  %s652 = scalar_lea.vmem %s575, %s650
                $region87: #{three_layers_fc.1} parent=81 // loop_footer
                  %s636 = sadd.s32 %s634, 1
                $region88: #{three_layers_fc.1} parent=81 // loop_footer_branch
                  %633 = sbr.rel target = $region84
                $region89: #{three_layers_fc.1} parent=81 // loop_exit
                  _
                %s653 = sshrl.u32 %s571, 1
                %s654 = sand.u32 %s571, 1
                %s655 = smul.u32 %s653, 2
                %s656 = smul.u32 8, %s655
                %s657 = scalar_lea.vmem %s564, %s656 [#allocation4]
                %s658 = smul.u32 8, %s655
                %s659 = scalar_lea.vmem %s575, %s658
                // While loop
                $region90: #{three_layers_fc.1} parent=81 // loop_pre_header
                  _
                $region91: #{three_layers_fc.1} parent=81 // loop_header
                  %s661 = sphi 0, %s663
                  %p662 = scmp.ge.s32.totalorder %s661, %s654
                  %s666 = sphi 0, %s673
                  %s667 = sphi %s657, %s676
                  %s668 = sphi %s659, %s677
                $region92: #{three_layers_fc.1} parent=81 // loop_header_branch
                  %665 = sbr.rel (%p662) target = $region96
                $region93: #{three_layers_fc.1} parent=81 // loop_body
                  %v669 = vld [vmem:[%s667] sm:$0xff]
                  %670 = vst [vmem:[%s668] sm:$0xff] %v669
                  %s671 = sadd.s32 1, %s666
                  %p672 = scmp.ge.s32.totalorder %s671, %s654
                  %s673 = scalar_select %p672, 0, %s671
                  %s674 = smul.u32 %s673, 8
                  %s675 = smul.u32 %s673, 8
                  %s676 = scalar_lea.vmem %s657, %s674 [#allocation4]
                  %s677 = scalar_lea.vmem %s659, %s675
                $region94: #{three_layers_fc.1} parent=81 // loop_footer
                  %s663 = sadd.s32 %s661, 1
                $region95: #{three_layers_fc.1} parent=81 // loop_footer_branch
                  %660 = sbr.rel target = $region91
                $region96: #{three_layers_fc.1} parent=81 // loop_exit
                  _
              $region82: #{three_layers_fc.1} parent=59 // pred_fallthru
                _
              // Predicated region
              $region97: #{three_layers_fc.1} parent=59 // pred_check
                _
              $region98: #{three_layers_fc.1} parent=59 // pred_check_branch
                %679 = sbr.rel target = $region100
              $region99: #{three_layers_fc.1} parent=59 // pred_region
                _
              $region100: #{three_layers_fc.1} parent=59 // pred_fallthru
                _
            $region60: #{three_layers_fc.1} parent=55 // pred_fallthru
              _
            // Predicated region
            $region61: #{three_layers_fc.1} parent=55 // pred_check
              _
            $region62: #{three_layers_fc.1} parent=55 // pred_check_branch
              %582 = sbr.rel target = $region64
            $region63: #{three_layers_fc.1} parent=55 // pred_region
              %s584 = sshrl.u32 %s571, 1
              // While loop
              $region65: #{three_layers_fc.1} parent=63 // loop_pre_header
                _
              $region66: #{three_layers_fc.1} parent=63 // loop_header
                %s586 = sphi 0, %s588
                %p587 = scmp.ge.s32.totalorder %s586, %s584
                %s591 = sphi 0, %s600
                %s592 = sphi %s564, %s603
                %s593 = sphi %s575, %s604
              $region67: #{three_layers_fc.1} parent=63 // loop_header_branch
                %590 = sbr.rel (%p587) target = $region71
              $region68: #{three_layers_fc.1} parent=63 // loop_body
                %v594 = vld [vmem:[%s592] sm:$0xff]
                %595 = vst [vmem:[%s593] sm:$0xff] %v594
                %v596 = vld [vmem:[%s592 + $0x8] sm:$0xff]
                %597 = vst [vmem:[%s593 + $0x8] sm:$0xff] %v596
                %s598 = sadd.s32 1, %s591
                %p599 = scmp.ge.s32.totalorder %s598, %s584
                %s600 = scalar_select %p599, 0, %s598
                %s601 = smul.u32 %s600, 16
                %s602 = smul.u32 %s600, 16
                %s603 = scalar_lea.vmem %s564, %s601 [#allocation4]
                %s604 = scalar_lea.vmem %s575, %s602
              $region69: #{three_layers_fc.1} parent=63 // loop_footer
                %s588 = sadd.s32 %s586, 1
              $region70: #{three_layers_fc.1} parent=63 // loop_footer_branch
                %585 = sbr.rel target = $region66
              $region71: #{three_layers_fc.1} parent=63 // loop_exit
                _
              %s605 = sshrl.u32 %s571, 1
              %s606 = sand.u32 %s571, 1
              %s607 = smul.u32 %s605, 2
              %s608 = smul.u32 8, %s607
              %s609 = scalar_lea.vmem %s564, %s608 [#allocation4]
              %s610 = smul.u32 8, %s607
              %s611 = scalar_lea.vmem %s575, %s610
              // While loop
              $region72: #{three_layers_fc.1} parent=63 // loop_pre_header
                _
              $region73: #{three_layers_fc.1} parent=63 // loop_header
                %s613 = sphi 0, %s615
                %p614 = scmp.ge.s32.totalorder %s613, %s606
                %s618 = sphi 0, %s625
                %s619 = sphi %s609, %s628
                %s620 = sphi %s611, %s629
              $region74: #{three_layers_fc.1} parent=63 // loop_header_branch
                %617 = sbr.rel (%p614) target = $region78
              $region75: #{three_layers_fc.1} parent=63 // loop_body
                %v621 = vld [vmem:[%s619] sm:$0xff]
                %622 = vst [vmem:[%s620] sm:$0xff] %v621
                %s623 = sadd.s32 1, %s618
                %p624 = scmp.ge.s32.totalorder %s623, %s606
                %s625 = scalar_select %p624, 0, %s623
                %s626 = smul.u32 %s625, 8
                %s627 = smul.u32 %s625, 8
                %s628 = scalar_lea.vmem %s609, %s626 [#allocation4]
                %s629 = scalar_lea.vmem %s611, %s627
              $region76: #{three_layers_fc.1} parent=63 // loop_footer
                %s615 = sadd.s32 %s613, 1
              $region77: #{three_layers_fc.1} parent=63 // loop_footer_branch
                %612 = sbr.rel target = $region73
              $region78: #{three_layers_fc.1} parent=63 // loop_exit
                _
            $region64: #{three_layers_fc.1} parent=55 // pred_fallthru
              _
          $region56: #{three_layers_fc.1} parent=51 // pred_fallthru
            _
          %680 = vnop
        $region52: #{three_layers_fc.1} parent=47 // pred_fallthru
          _
      $region48: #{three_layers_fc.1} parent=5 // pred_fallthru
        _
      %p681 = scmp.le.s32.totalorder 2, %s14
      // Predicated region
      $region101: #{three_layers_fc.1} parent=5 // pred_check
        %p682 = pneg %p681
      $region102: #{three_layers_fc.1} parent=5 // pred_check_branch
        %684 = sbr.rel (%p682) target = $region104
      $region103: #{three_layers_fc.1} parent=5 // pred_region
        %s685 = ssub.s32 %s14, 2
        // Predicated region
        $region105: #{three_layers_fc.1} parent=103 // pred_check
          %p686 = pneg %p195
        $region106: #{three_layers_fc.1} parent=103 // pred_check_branch
          %688 = sbr.rel (%p686) target = $region108
        $region107: #{three_layers_fc.1} parent=103 // pred_region
          %s689 = sand.u32 %s180, 1
          %s690 = sand.u32 %s180, 1
          %s691 = smul.addr %s690, 16
          %s692 = scalar_lea.vmem [#allocation4], %s691
        $region108: #{three_layers_fc.1} parent=103 // pred_fallthru
          _
      $region104: #{three_layers_fc.1} parent=5 // pred_fallthru
        _
    $region6: #{three_layers_fc.1} parent=1 // loop_footer
      %s18 = sadd.s32 1, %s14
    $region7: #{three_layers_fc.1} parent=1 // loop_footer_branch
      %13 = sbr.rel target = $region3
    $region8: #{three_layers_fc.1} parent=1 // loop_exit
      _

</llo_original>
